<compile_context>
chip_gen: v7x
topology: tpu7x:2x2x1
jax: 0.10.0
libtpu: 0.0.40
codegen_flags: <defaults>
</compile_context>

<pallas_src>
import jax
import jax.numpy as jnp
from jax.experimental import pallas as pl
from jax.experimental.pallas import tpu as pltpu


def _cdiv(a, b):
    return (a + b - 1) // b


def _round_up(x, m):
    return _cdiv(x, m) * m


def fcnn_kernel(x_ref, w1_ref, b1_ref, w2_ref, b2_ref, w3_ref, b3_ref, o_ref):
    # x_ref : (D,  TN) bf16      w1: (H1, D)  bf16   b1: (H1, 1) f32
    # h1    : (H1, TN) f32       w2: (H2, H1) f32    b2: (H2, 1) f32
    # h2    : (H2, TN) f32       w3: (1,  H2) f32    b3: (1,  1) f32
    # o_ref : (1,  TN)           (lane-dense output slab)
    x = x_ref[...]

    # Layer 1: bf16 MXU matmul, f32 accumulation; bias + ReLU in f32.
    h1 = jnp.dot(w1_ref[...], x, preferred_element_type=jnp.float32)
    h1 = jnp.maximum(h1 + b1_ref[...], 0.0)

    # Layers 2/3 are tiny (10x10, 1x10); keep them fully f32 -- their cost is
    # negligible next to the HBM stream of x.
    h2 = jnp.dot(w2_ref[...], h1, preferred_element_type=jnp.float32)
    h2 = jnp.maximum(h2 + b2_ref[...], 0.0)

    out = jnp.dot(w3_ref[...], h2, preferred_element_type=jnp.float32)
    o_ref[...] = (out + b3_ref[...]).astype(o_ref.dtype)


def _vmem_budget_and_limit():
    """Generation-aware VMEM plan: (budget for our tiles, scoped limit to ask for)."""
    try:
        cap = int(pltpu.get_tpu_info().vmem_capacity_bytes)
    except Exception:
        cap = 64 << 20  # be conservative: v7x per-TensorCore VMEM
    budget = min(cap // 2, 48 << 20)        # what the tile heuristic may plan for
    limit = min(cap - (8 << 20), 96 << 20)  # scoped VMEM limit requested from Mosaic
    return budget, max(limit, 16 << 20)


def _default_tile_n(N, D, H1, H2, OUT, vmem_budget):
    """Largest lane (batch) tile that fits the VMEM budget, >=2 grid steps."""
    # Steady-state VMEM bytes per lane column: double-buffered x (bf16),
    # double-buffered out (f32), f32 hidden intermediates; 1.5x slack for
    # compiler internal scratch.
    per_lane = 2 * (2 * D) + 2 * (4 * OUT) + 4 * (H1 + H2 + OUT)
    per_lane = int(per_lane * 1.5) + 16
    budget_tile = max(128, (vmem_budget // per_lane) // 128 * 128)
    # Keep >= 2 grid steps so both v7x TensorCores get work (on v5e/v6e this
    # still lets the pipeline overlap input DMA of step i+1 with output of i).
    half_batch = _round_up(max(_cdiv(N, 2), 1), 128)
    return max(128, min(budget_tile, half_batch, 1 << 16))


def fcnn_forward_t(xt, params, *, tile_n=None, out_dtype=jnp.float32):
    """Fused FCNN forward on a feature-major slab.

    xt: (D, N) bfloat16 (batch on the lane axis).  Supplying this directly
    from the producer avoids the wrapper-side transpose/cast HBM round trip.
    Returns the lane-dense (OUT, N) output slab (OUT == 1 for FCNN).
    """
    D, N = xt.shape
    H1 = params["w1"].shape[0]
    H2 = params["w2"].shape[0]
    OUT = params["w3"].shape[0]

    vmem_budget, vmem_limit = _vmem_budget_and_limit()
    if tile_n is None:
        tile_n = _default_tile_n(N, D, H1, H2, OUT, vmem_budget)
    assert tile_n % 128 == 0, "batch (lane) tile must be a multiple of 128"

    w1 = params["w1"].astype(jnp.bfloat16)                     # (H1, D)
    b1 = params["b1"].reshape(H1, 1).astype(jnp.float32)
    w2 = params["w2"].astype(jnp.float32)                      # (H2, H1)
    b2 = params["b2"].reshape(H2, 1).astype(jnp.float32)
    w3 = params["w3"].astype(jnp.float32)                      # (OUT, H2)
    b3 = params["b3"].reshape(OUT, 1).astype(jnp.float32)

    # No host-side pad: Pallas clips the trailing partial block on both the
    # streamed x read and the output store; garbage lanes never reach cols < N.
    grid = (pl.cdiv(N, tile_n),)

    # TODO(synk): for D not a multiple of 16, bf16 sublane packing of the
    # (D, tile_n) block can inflate the x stream; pack feature-row pairs into
    # uint32 host-side + pltpu.bitcast in-kernel if profiling shows 2x DMA.
    # TODO(synk): optional fp8 (e4m3) streaming of x/w1 on v7x would halve the
    # dominant stream; gated on an accuracy budget, so not enabled here.
    in_specs = [
        pl.BlockSpec((D, tile_n), lambda i: (0, i)),   # x^T (streamed, bf16)
        pl.BlockSpec((H1, D), lambda i: (0, 0)),       # w1 (resident)
        pl.BlockSpec((H1, 1), lambda i: (0, 0)),       # b1
        pl.BlockSpec((H2, H1), lambda i: (0, 0)),      # w2
        pl.BlockSpec((H2, 1), lambda i: (0, 0)),       # b2
        pl.BlockSpec((OUT, H2), lambda i: (0, 0)),     # w3
        pl.BlockSpec((OUT, 1), lambda i: (0, 0)),      # b3
    ]
    out_spec = pl.BlockSpec((OUT, tile_n), lambda i: (0, i))

    return pl.pallas_call(
        fcnn_kernel,
        out_shape=jax.ShapeDtypeStruct((OUT, N), out_dtype),
        grid_spec=pltpu.PrefetchScalarGridSpec(
            num_scalar_prefetch=0,
            grid=grid,
            in_specs=in_specs,
            out_specs=out_spec,
        ),
        compiler_params=pltpu.CompilerParams(
            dimension_semantics=("parallel",),
            vmem_limit_bytes=int(vmem_limit),
        ),
    )(xt, w1, b1, w2, b2, w3, b3)


def fcnn_forward(x, params, *, tile_n=None, out_dtype=jnp.float32):
    """Fused FCNN forward matching the PyTorch module.

    x: (N, D) float32.  Returns (N, 1).
    Prefer fcnn_forward_t() if the producer can hand over a (D, N) bf16 slab;
    the transpose/cast below is un-hidden HBM traffic outside the kernel.
    """
    xt = x.T.astype(jnp.bfloat16)                      # (D, N), fused cast+transpose
    out_t = fcnn_forward_t(xt, params, tile_n=tile_n, out_dtype=out_dtype)
    return out_t.T                                     # (N, OUT); OUT == 1


def init_fcnn_params(key, input_size):
    """Deterministic init matching nn.Linear's U(-1/sqrt(fan_in), 1/sqrt(fan_in)).

    Weights stored PyTorch-style as (out_features, in_features)."""
    def linear(k, fan_in, fan_out):
        kw, kb = jax.random.split(k)
        bound = 1.0 / jnp.sqrt(fan_in)
        w = jax.random.uniform(kw, (fan_out, fan_in), jnp.float32, -bound, bound)
        b = jax.random.uniform(kb, (fan_out,), jnp.float32, -bound, bound)
        return w, b

    k1, k2, k3 = jax.random.split(key, 3)
    w1, b1 = linear(k1, input_size, 10)
    w2, b2 = linear(k2, 10, 10)
    w3, b3 = linear(k3, 10, 1)
    return {"w1": w1, "b1": b1, "w2": w2, "b2": b2, "w3": w3, "b3": b3}


def fcnn_ref(x, p, *, bf16_layer1=False):
    """Pure-JAX reference (PyTorch semantics). With bf16_layer1=True it
    consumes the same bf16-rounded x/w1 the kernel streams."""
    if bf16_layer1:
        x1 = x.astype(jnp.bfloat16).astype(jnp.float32)
        w1 = p["w1"].astype(jnp.bfloat16).astype(jnp.float32)
    else:
        x1, w1 = x, p["w1"]
    h1 = jnp.maximum(x1 @ w1.T + p["b1"], 0.0)
    h2 = jnp.maximum(h1 @ p["w2"].T + p["b2"], 0.0)
    return h2 @ p["w3"].T + p["b3"]


if __name__ == "__main__":
    key = jax.random.PRNGKey(0)
    k_x, k_p = jax.random.split(key)

    input_size = 8
    batch = 300   # not a multiple of 128 -> exercises the partial edge block

    x = jax.random.normal(k_x, (batch, input_size), jnp.float32)
    params = init_fcnn_params(k_p, input_size)

    # Default tile heuristic: for N=300 it picks tile_n=256 -> a 2-step
    # "parallel" grid with a clipped 44-column tail block (no host-side pad).
    out = fcnn_forward(x, params)
    out = jax.block_until_ready(out)
    assert out.shape == (batch, 1)

    # Tight check vs a reference using the same bf16-rounded x/w1 the kernel
    # streams (bf16 x bf16 products are exact in the f32 accumulator).
    ref_bf16 = fcnn_ref(x, params, bf16_layer1=True)
    assert jnp.allclose(out, ref_bf16, atol=1e-4, rtol=1e-4), float(
        jnp.max(jnp.abs(out - ref_bf16)))

    # Looser sanity check vs the full-f32 PyTorch-equivalent forward
    # (difference is only the bf16 rounding of the streamed input).
    ref_f32 = fcnn_ref(x, params, bf16_layer1=False)
    assert jnp.allclose(out, ref_f32, atol=5e-2, rtol=5e-2)

    # Also exercise an explicit single-128-lane tile (3 grid steps, tail clip).
    out_small = jax.block_until_ready(fcnn_forward(x, params, tile_n=128))
    assert jnp.allclose(out_small, ref_bf16, atol=1e-4, rtol=1e-4)

    print("KERNEL_OK")
</pallas_src>

<mosaic_0001>
module attributes {stable_mosaic.version = 11 : i64} {
  func.func @fcnn_kernel(%arg0: i32, %arg1: memref<8x256xbf16, #tpu.memory_space<vmem>>, %arg2: memref<10x8xbf16, #tpu.memory_space<vmem>>, %arg3: memref<10x1xf32, #tpu.memory_space<vmem>>, %arg4: memref<10x10xf32, #tpu.memory_space<vmem>>, %arg5: memref<10x1xf32, #tpu.memory_space<vmem>>, %arg6: memref<1x10xf32, #tpu.memory_space<vmem>>, %arg7: memref<1x1xf32, #tpu.memory_space<vmem>>, %arg8: memref<1x256xf32, #tpu.memory_space<vmem>>) attributes {dimension_semantics = [#tpu.dimension_semantics<parallel>], iteration_bounds = array<i64: 2>, scalar_prefetch = 0 : i64, scratch_operands = 0 : i64, tpu.core_type = #tpu.core_type<tc>, window_params = [{transform_indices = @transform_0, window_bounds = array<i64: 8, 256>}, {pipeline_mode = #tpu.pipeline_mode<synchronous>, transform_indices = @transform_1, window_bounds = array<i64: 10, 8>}, {pipeline_mode = #tpu.pipeline_mode<synchronous>, transform_indices = @transform_2, window_bounds = array<i64: 10, 1>}, {pipeline_mode = #tpu.pipeline_mode<synchronous>, transform_indices = @transform_3, window_bounds = array<i64: 10, 10>}, {pipeline_mode = #tpu.pipeline_mode<synchronous>, transform_indices = @transform_4, window_bounds = array<i64: 10, 1>}, {pipeline_mode = #tpu.pipeline_mode<synchronous>, transform_indices = @transform_5, window_bounds = array<i64: 1, 10>}, {pipeline_mode = #tpu.pipeline_mode<synchronous>, transform_indices = @transform_6, window_bounds = array<i64: 1, 1>}, {transform_indices = @transform_7, window_bounds = array<i64: 1, 256>}]} {
    %c0 = arith.constant 0 : index
    %c0_0 = arith.constant 0 : index
    %0 = vector.load %arg1[%c0, %c0_0] : memref<8x256xbf16, #tpu.memory_space<vmem>>, vector<8x256xbf16>
    %c0_1 = arith.constant 0 : index
    %c0_2 = arith.constant 0 : index
    %1 = vector.load %arg2[%c0_1, %c0_2] : memref<10x8xbf16, #tpu.memory_space<vmem>>, vector<10x8xbf16>
    %cst = arith.constant dense<0.000000e+00> : vector<10x256xf32>
    %2 = tpu.matmul %1, %0, %cst {dimension_numbers = #tpu.dot_dimension_numbers<[1], [0], [0], [1], [0, 0, 1, 1], [], []>} : vector<10x8xbf16>, vector<8x256xbf16>, vector<10x256xf32> -> vector<10x256xf32>
    %c0_3 = arith.constant 0 : index
    %c0_4 = arith.constant 0 : index
    %3 = vector.load %arg3[%c0_3, %c0_4] : memref<10x1xf32, #tpu.memory_space<vmem>>, vector<10x1xf32>
    %4 = vector.broadcast %3 : vector<10x1xf32> to vector<10x256xf32>
    %5 = arith.addf %2, %4 : vector<10x256xf32>
    %cst_5 = arith.constant 0.000000e+00 : f32
    %6 = vector.broadcast %cst_5 : f32 to vector<10x256xf32>
    %7 = arith.maximumf %5, %6 : vector<10x256xf32>
    %c0_6 = arith.constant 0 : index
    %c0_7 = arith.constant 0 : index
    %8 = vector.load %arg4[%c0_6, %c0_7] : memref<10x10xf32, #tpu.memory_space<vmem>>, vector<10x10xf32>
    %cst_8 = arith.constant dense<0.000000e+00> : vector<10x256xf32>
    %9 = tpu.matmul %8, %7, %cst_8 {dimension_numbers = #tpu.dot_dimension_numbers<[1], [0], [0], [1], [0, 0, 1, 1], [], []>} : vector<10x10xf32>, vector<10x256xf32>, vector<10x256xf32> -> vector<10x256xf32>
    %c0_9 = arith.constant 0 : index
    %c0_10 = arith.constant 0 : index
    %10 = vector.load %arg5[%c0_9, %c0_10] : memref<10x1xf32, #tpu.memory_space<vmem>>, vector<10x1xf32>
    %11 = vector.broadcast %10 : vector<10x1xf32> to vector<10x256xf32>
    %12 = arith.addf %9, %11 : vector<10x256xf32>
    %cst_11 = arith.constant 0.000000e+00 : f32
    %13 = vector.broadcast %cst_11 : f32 to vector<10x256xf32>
    %14 = arith.maximumf %12, %13 : vector<10x256xf32>
    %c0_12 = arith.constant 0 : index
    %c0_13 = arith.constant 0 : index
    %15 = vector.load %arg6[%c0_12, %c0_13] : memref<1x10xf32, #tpu.memory_space<vmem>>, vector<1x10xf32>
    %cst_14 = arith.constant dense<0.000000e+00> : vector<1x256xf32>
    %16 = tpu.matmul %15, %14, %cst_14 {dimension_numbers = #tpu.dot_dimension_numbers<[1], [0], [0], [1], [0, 0, 1, 1], [], []>} : vector<1x10xf32>, vector<10x256xf32>, vector<1x256xf32> -> vector<1x256xf32>
    %c0_15 = arith.constant 0 : index
    %c0_16 = arith.constant 0 : index
    %17 = vector.load %arg7[%c0_15, %c0_16] : memref<1x1xf32, #tpu.memory_space<vmem>>, vector<1x1xf32>
    %18 = vector.broadcast %17 : vector<1x1xf32> to vector<1x256xf32>
    %19 = arith.addf %16, %18 : vector<1x256xf32>
    %c0_17 = arith.constant 0 : index
    %c0_18 = arith.constant 0 : index
    %20 = vector.load %arg8[%c0_17, %c0_18] : memref<1x256xf32, #tpu.memory_space<vmem>>, vector<1x256xf32>
    tpu.vector_store %arg8[%c0_17, %c0_18], %19 {strides = array<i32>} : memref<1x256xf32, #tpu.memory_space<vmem>>, vector<1x256xf32>,
    return
  }
  func.func @transform_0(%arg0: i32) -> (i32, i32) {
    %c0_i32 = arith.constant 0 : i32
    %c0_i32_0 = arith.constant 0 : i32
    return %c0_i32, %arg0 : i32, i32
  }
  func.func @transform_1(%arg0: i32) -> (i32, i32) {
    %c0_i32 = arith.constant 0 : i32
    %c0_i32_0 = arith.constant 0 : i32
    %c0_i32_1 = arith.constant 0 : i32
    return %c0_i32, %c0_i32_0 : i32, i32
  }
  func.func @transform_2(%arg0: i32) -> (i32, i32) {
    %c0_i32 = arith.constant 0 : i32
    %c0_i32_0 = arith.constant 0 : i32
    %c0_i32_1 = arith.constant 0 : i32
    return %c0_i32, %c0_i32_0 : i32, i32
  }
  func.func @transform_3(%arg0: i32) -> (i32, i32) {
    %c0_i32 = arith.constant 0 : i32
    %c0_i32_0 = arith.constant 0 : i32
    %c0_i32_1 = arith.constant 0 : i32
    return %c0_i32, %c0_i32_0 : i32, i32
  }
  func.func @transform_4(%arg0: i32) -> (i32, i32) {
    %c0_i32 = arith.constant 0 : i32
    %c0_i32_0 = arith.constant 0 : i32
    %c0_i32_1 = arith.constant 0 : i32
    return %c0_i32, %c0_i32_0 : i32, i32
  }
  func.func @transform_5(%arg0: i32) -> (i32, i32) {
    %c0_i32 = arith.constant 0 : i32
    %c0_i32_0 = arith.constant 0 : i32
    %c0_i32_1 = arith.constant 0 : i32
    return %c0_i32, %c0_i32_0 : i32, i32
  }
  func.func @transform_6(%arg0: i32) -> (i32, i32) {
    %c0_i32 = arith.constant 0 : i32
    %c0_i32_0 = arith.constant 0 : i32
    %c0_i32_1 = arith.constant 0 : i32
    return %c0_i32, %c0_i32_0 : i32, i32
  }
  func.func @transform_7(%arg0: i32) -> (i32, i32) {
    %c0_i32 = arith.constant 0 : i32
    %c0_i32_0 = arith.constant 0 : i32
    return %c0_i32, %arg0 : i32, i32
  }
}

</mosaic_0001>

<llo_original>
// kernel: tpu_custom_call.1
$region0: #{tpu_custom_call.1}
  #allocation0 [shape = 'u32[]', space=smem, size = 0x4, offset = 0x4, fixed_abs, tag = 'smem constant byte address 0x4 - core index']
  #allocation1 [shape = 'u32[144,128]{1,0:T(1,128)}', space=vmem, size = 0x12000, scoped, tag = 'internal scratch']
  #allocation2 [shape = 'f32[1,1]{1,0:T(1,128)S(1)}', space=vmem, size = 0x200, scoped, tag = 'scoped memory for tpu_custom_call.1']
  %s0 = inlined_call_operand.vmem [shape: bf16[8,300], index: 0, kind: input, shape index: {}]
  %s1 = inlined_call_operand.vmem [shape: bf16[10,8], index: 1, kind: input, shape index: {}]
  %s2 = inlined_call_operand.vmem [shape: f32[10,1], index: 2, kind: input, shape index: {}]
  %s3 = inlined_call_operand.vmem [shape: f32[10,10], index: 3, kind: input, shape index: {}]
  %s4 = inlined_call_operand.vmem [shape: f32[10,1], index: 4, kind: input, shape index: {}]
  %s5 = inlined_call_operand.vmem [shape: f32[1,10], index: 5, kind: input, shape index: {}]
  %s6 = inlined_call_operand.<no memory space> [shape: f32[1,1], index: 6, kind: input, shape index: {}]
  %s7 = inlined_call_operand.hbm [shape: f32[1,300], index: 7, kind: output, shape index: {}]
  %s8 = sld [smem:[#allocation0]]
  $region61: #{tpu_custom_call.1} parent=0
    _
  %s10 = ssub.s32 1, %s8
  %s11 = scalar_select 0, %s10, %s8
  %v12 = vstv %s6
  %13 = vst [vmem:[#allocation2] sm:$0x1] %v12
  $region1: #{tpu_custom_call.1} parent=0
    #allocation3 [shape = 'u8[2048]{0}', space=vmem, size = 0x800, scoped, tag = 'output window, operand 0']
    #allocation4 [shape = 's32[2]{0}', space=sflag, size = 0x8, scoped, tag = 'scoped memory for tpu_custom_call.1']
    %14 = vsyncpa [#allocation4], 0
    %s15 = scalar_lea.sflag [#allocation4], 1
    %16 = vsyncpa %s15, 0
    loop: start=0, step=1, limit=4
    $region2: #{tpu_custom_call.1} parent=1 // loop_pre_header
      _
    $region3: #{tpu_custom_call.1} parent=1 // loop_header
      %s18 = sphi 0, %s22
      %p19 = scmp.ge.s32.totalorder %s18, 4
      %s28 = sphi 0, %s30
      %s31 = sphi 0, %s28
      %s32 = sphi 0, %s31
      %s48 = sphi 0, %s32
      %s52 = sphi 0, %s52
      %s54 = sphi 0, %s52
      %s55 = sphi 0, %s54
      %s69 = sphi 0, %s55
      %s73 = sphi 0, %s73
      %s75 = sphi 0, %s73
      %s76 = sphi 0, %s75
      %s90 = sphi 0, %s76
      %s94 = sphi 0, %s94
      %s96 = sphi 0, %s94
      %s97 = sphi 0, %s96
      %s111 = sphi 0, %s97
      %s115 = sphi 0, %s115
      %s117 = sphi 0, %s115
      %s118 = sphi 0, %s117
      %s132 = sphi 0, %s118
      %s136 = sphi 0, %s136
      %s138 = sphi 0, %s136
      %s139 = sphi 0, %s138
      %s153 = sphi 0, %s139
      %s157 = sphi 0, %s157
      %s159 = sphi 0, %s157
      %s160 = sphi 0, %s159
      %s174 = sphi 0, %s160
      %s180 = sphi 0, %s182
      %s183 = sphi 0, %s180
      %s184 = sphi 0, %s183
      %s200 = sphi 0, %s184
    $region4: #{tpu_custom_call.1} parent=1 // loop_header_branch
      %21 = sbr.rel (%p19) target = $region8
    $region5: #{tpu_custom_call.1} parent=1 // loop_body
      %s23 = ssub.s32 %s18, 1
      %s24 = ssub.s32 %s18, 2
      %s25 = sadd.s32 %s18, 1
      %s26 = ssub.s32 %s18, %s25
      %p27 = scmp.eq.s32.totalorder %s26, 0
      %s29 = sadd.s32 %s28, 1
      %s30 = scalar_select %p27, %s28, %s29
      %p33 = pneg %p27
      %p34 = scmp.eq.s32.totalorder %s18, 1
      %p35 = por %p33, %p34
      %p36 = scmp.ne.s32.totalorder %s28, %s31
      %p37 = scmp.eq.s32.totalorder %s18, 0
      %p38 = por %p36, %p37
      %p39 = scmp.ne.s32.totalorder %s28, %s31
      %p40 = scmp.eq.s32.totalorder %s23, 1
      %p41 = por %p39, %p40
      %p42 = scmp.ne.s32.totalorder %s31, %s32
      %p43 = scmp.eq.s32.totalorder %s23, 0
      %p44 = por %p42, %p43
      %p45 = scmp.ne.s32.totalorder %s31, %s32
      %p46 = scmp.eq.s32.totalorder %s24, 1
      %p47 = por %p45, %p46
      %p49 = scmp.ne.s32.totalorder %s32, %s48
      %p50 = scmp.eq.s32.totalorder %s24, 0
      %p51 = por %p49, %p50
      %s53 = sadd.s32 %s52, 1
      %p56 = scmp.eq.s32.totalorder %s18, 1
      %p57 = scmp.ne.s32.totalorder %s52, %s54
      %p58 = scmp.eq.s32.totalorder %s18, 0
      %p59 = por %p57, %p58
      %p60 = scmp.ne.s32.totalorder %s52, %s54
      %p61 = scmp.eq.s32.totalorder %s23, 1
      %p62 = por %p60, %p61
      %p63 = scmp.ne.s32.totalorder %s54, %s55
      %p64 = scmp.eq.s32.totalorder %s23, 0
      %p65 = por %p63, %p64
      %p66 = scmp.ne.s32.totalorder %s54, %s55
      %p67 = scmp.eq.s32.totalorder %s24, 1
      %p68 = por %p66, %p67
      %p70 = scmp.ne.s32.totalorder %s55, %s69
      %p71 = scmp.eq.s32.totalorder %s24, 0
      %p72 = por %p70, %p71
      %s74 = sadd.s32 %s73, 1
      %p77 = scmp.eq.s32.totalorder %s18, 1
      %p78 = scmp.ne.s32.totalorder %s73, %s75
      %p79 = scmp.eq.s32.totalorder %s18, 0
      %p80 = por %p78, %p79
      %p81 = scmp.ne.s32.totalorder %s73, %s75
      %p82 = scmp.eq.s32.totalorder %s23, 1
      %p83 = por %p81, %p82
      %p84 = scmp.ne.s32.totalorder %s75, %s76
      %p85 = scmp.eq.s32.totalorder %s23, 0
      %p86 = por %p84, %p85
      %p87 = scmp.ne.s32.totalorder %s75, %s76
      %p88 = scmp.eq.s32.totalorder %s24, 1
      %p89 = por %p87, %p88
      %p91 = scmp.ne.s32.totalorder %s76, %s90
      %p92 = scmp.eq.s32.totalorder %s24, 0
      %p93 = por %p91, %p92
      %s95 = sadd.s32 %s94, 1
      %p98 = scmp.eq.s32.totalorder %s18, 1
      %p99 = scmp.ne.s32.totalorder %s94, %s96
      %p100 = scmp.eq.s32.totalorder %s18, 0
      %p101 = por %p99, %p100
      %p102 = scmp.ne.s32.totalorder %s94, %s96
      %p103 = scmp.eq.s32.totalorder %s23, 1
      %p104 = por %p102, %p103
      %p105 = scmp.ne.s32.totalorder %s96, %s97
      %p106 = scmp.eq.s32.totalorder %s23, 0
      %p107 = por %p105, %p106
      %p108 = scmp.ne.s32.totalorder %s96, %s97
      %p109 = scmp.eq.s32.totalorder %s24, 1
      %p110 = por %p108, %p109
      %p112 = scmp.ne.s32.totalorder %s97, %s111
      %p113 = scmp.eq.s32.totalorder %s24, 0
      %p114 = por %p112, %p113
      %s116 = sadd.s32 %s115, 1
      %p119 = scmp.eq.s32.totalorder %s18, 1
      %p120 = scmp.ne.s32.totalorder %s115, %s117
      %p121 = scmp.eq.s32.totalorder %s18, 0
      %p122 = por %p120, %p121
      %p123 = scmp.ne.s32.totalorder %s115, %s117
      %p124 = scmp.eq.s32.totalorder %s23, 1
      %p125 = por %p123, %p124
      %p126 = scmp.ne.s32.totalorder %s117, %s118
      %p127 = scmp.eq.s32.totalorder %s23, 0
      %p128 = por %p126, %p127
      %p129 = scmp.ne.s32.totalorder %s117, %s118
      %p130 = scmp.eq.s32.totalorder %s24, 1
      %p131 = por %p129, %p130
      %p133 = scmp.ne.s32.totalorder %s118, %s132
      %p134 = scmp.eq.s32.totalorder %s24, 0
      %p135 = por %p133, %p134
      %s137 = sadd.s32 %s136, 1
      %p140 = scmp.eq.s32.totalorder %s18, 1
      %p141 = scmp.ne.s32.totalorder %s136, %s138
      %p142 = scmp.eq.s32.totalorder %s18, 0
      %p143 = por %p141, %p142
      %p144 = scmp.ne.s32.totalorder %s136, %s138
      %p145 = scmp.eq.s32.totalorder %s23, 1
      %p146 = por %p144, %p145
      %p147 = scmp.ne.s32.totalorder %s138, %s139
      %p148 = scmp.eq.s32.totalorder %s23, 0
      %p149 = por %p147, %p148
      %p150 = scmp.ne.s32.totalorder %s138, %s139
      %p151 = scmp.eq.s32.totalorder %s24, 1
      %p152 = por %p150, %p151
      %p154 = scmp.ne.s32.totalorder %s139, %s153
      %p155 = scmp.eq.s32.totalorder %s24, 0
      %p156 = por %p154, %p155
      %s158 = sadd.s32 %s157, 1
      %p161 = scmp.eq.s32.totalorder %s18, 1
      %p162 = scmp.ne.s32.totalorder %s157, %s159
      %p163 = scmp.eq.s32.totalorder %s18, 0
      %p164 = por %p162, %p163
      %p165 = scmp.ne.s32.totalorder %s157, %s159
      %p166 = scmp.eq.s32.totalorder %s23, 1
      %p167 = por %p165, %p166
      %p168 = scmp.ne.s32.totalorder %s159, %s160
      %p169 = scmp.eq.s32.totalorder %s23, 0
      %p170 = por %p168, %p169
      %p171 = scmp.ne.s32.totalorder %s159, %s160
      %p172 = scmp.eq.s32.totalorder %s24, 1
      %p173 = por %p171, %p172
      %p175 = scmp.ne.s32.totalorder %s160, %s174
      %p176 = scmp.eq.s32.totalorder %s24, 0
      %p177 = por %p175, %p176
      %s178 = ssub.s32 %s18, %s25
      %p179 = scmp.eq.s32.totalorder %s178, 0
      %s181 = sadd.s32 %s180, 1
      %s182 = scalar_select %p179, %s180, %s181
      %p185 = pneg %p179
      %p186 = scmp.eq.s32.totalorder %s18, 1
      %p187 = por %p185, %p186
      %p188 = scmp.ne.s32.totalorder %s180, %s183
      %p189 = scmp.eq.s32.totalorder %s18, 0
      %p190 = por %p188, %p189
      %p191 = scmp.ne.s32.totalorder %s180, %s183
      %p192 = scmp.eq.s32.totalorder %s23, 1
      %p193 = por %p191, %p192
      %p194 = scmp.ne.s32.totalorder %s183, %s184
      %p195 = scmp.eq.s32.totalorder %s23, 0
      %p196 = por %p194, %p195
      %p197 = scmp.ne.s32.totalorder %s183, %s184
      %p198 = scmp.eq.s32.totalorder %s24, 1
      %p199 = por %p197, %p198
      %p201 = scmp.ne.s32.totalorder %s184, %s200
      %p202 = scmp.eq.s32.totalorder %s24, 0
      %p203 = por %p201, %p202
      %p204 = scmp.le.s32.totalorder 1, %s18
      %p205 = scmp.lt.s32.totalorder %s18, 3
      %p206 = pnand %p204, %p205
      %p207 = pneg %p206
      // Predicated region
      $region9: #{tpu_custom_call.1} parent=5 // pred_check
        _
      $region10: #{tpu_custom_call.1} parent=5 // pred_check_branch
        %209 = sbr.rel (%p206) target = $region12
      $region11: #{tpu_custom_call.1} parent=5 // pred_region
        %s210 = ssub.s32 %s18, 1
        // Predicated region
        $region13: #{tpu_custom_call.1} parent=11 // pred_check
          %p211 = pneg %p65
        $region14: #{tpu_custom_call.1} parent=11 // pred_check_branch
          %213 = sbr.rel (%p211) target = $region16
        $region15: #{tpu_custom_call.1} parent=11 // pred_region
          _
        $region16: #{tpu_custom_call.1} parent=11 // pred_fallthru
          _
        // Predicated region
        $region17: #{tpu_custom_call.1} parent=11 // pred_check
          %p214 = pneg %p86
        $region18: #{tpu_custom_call.1} parent=11 // pred_check_branch
          %216 = sbr.rel (%p214) target = $region20
        $region19: #{tpu_custom_call.1} parent=11 // pred_region
          _
        $region20: #{tpu_custom_call.1} parent=11 // pred_fallthru
          _
        // Predicated region
        $region21: #{tpu_custom_call.1} parent=11 // pred_check
          %p217 = pneg %p107
        $region22: #{tpu_custom_call.1} parent=11 // pred_check_branch
          %219 = sbr.rel (%p217) target = $region24
        $region23: #{tpu_custom_call.1} parent=11 // pred_region
          _
        $region24: #{tpu_custom_call.1} parent=11 // pred_fallthru
          _
        // Predicated region
        $region25: #{tpu_custom_call.1} parent=11 // pred_check
          %p220 = pneg %p128
        $region26: #{tpu_custom_call.1} parent=11 // pred_check_branch
          %222 = sbr.rel (%p220) target = $region28
        $region27: #{tpu_custom_call.1} parent=11 // pred_region
          _
        $region28: #{tpu_custom_call.1} parent=11 // pred_fallthru
          _
        // Predicated region
        $region29: #{tpu_custom_call.1} parent=11 // pred_check
          %p223 = pneg %p149
        $region30: #{tpu_custom_call.1} parent=11 // pred_check_branch
          %225 = sbr.rel (%p223) target = $region32
        $region31: #{tpu_custom_call.1} parent=11 // pred_region
          _
        $region32: #{tpu_custom_call.1} parent=11 // pred_fallthru
          _
        // Predicated region
        $region33: #{tpu_custom_call.1} parent=11 // pred_check
          %p226 = pneg %p170
        $region34: #{tpu_custom_call.1} parent=11 // pred_check_branch
          %228 = sbr.rel (%p226) target = $region36
        $region35: #{tpu_custom_call.1} parent=11 // pred_region
          _
        $region36: #{tpu_custom_call.1} parent=11 // pred_fallthru
          _
      $region12: #{tpu_custom_call.1} parent=5 // pred_fallthru
        _
      %p229 = scmp.lt.s32.totalorder %s18, 2
      // Predicated region
      $region37: #{tpu_custom_call.1} parent=5 // pred_check
        %p230 = pneg %p229
      $region38: #{tpu_custom_call.1} parent=5 // pred_check_branch
        %232 = sbr.rel (%p230) target = $region40
      $region39: #{tpu_custom_call.1} parent=5 // pred_region
        // Predicated region
        $region41: #{tpu_custom_call.1} parent=39 // pred_check
          %p233 = pneg %p38
        $region42: #{tpu_custom_call.1} parent=39 // pred_check_branch
          %235 = sbr.rel (%p233) target = $region44
        $region43: #{tpu_custom_call.1} parent=39 // pred_region
          %s236 = smul.u32 2, %s18
          %s237 = ssub.s32 3, %s236
          %p238 = scmp.lt.s32.totalorder %s237, 2
          %s239 = scalar_select %p238, %s237, 2
          %s240 = smul.u32 64, %s239
          %p241 = scmp.lt.s32.totalorder %s236, 2
          %s242 = scalar_select %p241, %s236, 2
          %s243 = smul.addr %s242, 4
          %s244 = scalar_lea.vmem %s0, %s243
          %s245 = smul.u32 2, %s18
          %s246 = ssub.s32 3, %s245
          %p247 = scmp.lt.s32.totalorder %s246, 2
          %s248 = scalar_select %p247, %s246, 2
          %s249 = smul.u32 64, %s248
        $region44: #{tpu_custom_call.1} parent=39 // pred_fallthru
          _
      $region40: #{tpu_custom_call.1} parent=5 // pred_fallthru
        _
      %p250 = scmp.le.s32.totalorder 1, %s18
      %p251 = scmp.lt.s32.totalorder %s18, 3
      %p252 = pnand %p250, %p251
      %p253 = pneg %p252
      // Predicated region
      $region45: #{tpu_custom_call.1} parent=5 // pred_check
        _
      $region46: #{tpu_custom_call.1} parent=5 // pred_check_branch
        %255 = sbr.rel (%p252) target = $region48
      $region47: #{tpu_custom_call.1} parent=5 // pred_region
        %s256 = ssub.s32 %s18, 1
        %s257 = smul.u32 2, %s23
        %s258 = ssub.s32 3, %s257
        %p259 = scmp.lt.s32.totalorder %s258, 2
        %s260 = scalar_select %p259, %s258, 2
        %s261 = smul.u32 64, %s260
        %p262 = scmp.lt.s32.totalorder %s257, 2
        %s263 = scalar_select %p262, %s257, 2
        %s264 = smul.addr %s263, 4
        %s265 = scalar_lea.vmem %s0, %s264
        %p266 = pneg %p44
        %p267 = pneg %p41
        %p268 = pneg %p65
        %p269 = pneg %p62
        %p270 = pneg %p86
        %p271 = pneg %p83
        %p272 = pneg %p107
        %p273 = pneg %p104
        %p274 = pneg %p128
        %p275 = pneg %p125
        %p276 = pneg %p149
        %p277 = pneg %p146
        %p278 = pneg %p170
        %p279 = pneg %p167
        %p280 = pneg %p196
        %p281 = pneg %p193
        %s282 = sand.u32 %s183, 1
        %s283 = scalar_lea.sflag [#allocation4], %s282
        %s284 = sand.u32 %s183, 1
        %s285 = smul.addr %s284, 2
        %s286 = scalar_lea.vmem [#allocation3], %s285
        %s287 = smul.u32 2, %s23
        %s288 = ssub.s32 3, %s287
        %p289 = scmp.lt.s32.totalorder %s288, 2
        %s290 = scalar_select %p289, %s288, 2
        %s291 = smul.u32 64, %s290
        %p292 = scmp.lt.s32.totalorder %s287, 2
        %s293 = scalar_select %p292, %s287, 2
        %s294 = smul.addr %s293, 4
        %s295 = scalar_lea.vmem %s0, %s294
        %s296 = smul.u32 2, %s23
        %s297 = ssub.s32 3, %s296
        %p298 = scmp.lt.s32.totalorder %s297, 2
        %s299 = scalar_select %p298, %s297, 2
        %s300 = smul.u32 64, %s299
        %s301 = smul.u32 2, %s23
        %s302 = ssub.s32 3, %s301
        %p303 = scmp.lt.s32.totalorder %s302, 2
        %s304 = scalar_select %p303, %s302, 2
        %s305 = smul.u32 16, %s304
        %v307 = vld [vmem:[%s295] sm:$0xff]
        %v308 = vld [vmem:[%s1] sm:$0xf]
        %v309 = vld [vmem:[%s1 + $0x4] sm:$0x1]
        %v310 = vld [vmem:[%s2] sm:$0xff]
        %v311 = vld [vmem:[%s2 + $0x8] sm:$0x3]
        %313 = vset.pattern.permute.xlu0 0
        %314 = vperm.xlu0 %313, %v310
        %v315 = vpop.permute.xlu0 %314
        %318 = vset.pattern.permute.xlu0 0
        %319 = vperm.xlu0 %318, %v311
        %v320 = vpop.permute.xlu0 %319
        %v324 = vunpack.c.l.b16 %v308
        %v325 = vunpack.c.l.b16 %v309
        %v326 = vpack.c.b16 %v325, %v324
        %v328 = vunpack.c.l.b16 %v307
        %v329 = vunpack.c.h.b16 %v307
        %v330 = vpack.c.b16 %v328, %v328
        %v331 = vpack.c.b16 %v329, %v329
        %vm332 = vcmask 64512
        %v334 = vsel %vm332, %v326, 0
        %vm336 = vcmask 1043456
        %v338 = vsel %vm336, %v330, 0
        %v341 = vsel %vm336, %v331, 0
        %343 = vmatprep.subr.bf16.mxu0 %v341
        %344 = vmatpush1.bf16.msra.mxu0 %v338
        %345 = vmatprep.subr.bf16.mxu0 0
        %346 = vmatpush1.bf16.msra.mxu0 0
        %347 = vmatprep.subr.bf16.mxu0 0
        %348 = vmatpush1.bf16.msra.mxu0 0
        %349 = vmatprep.subr.bf16.mxu0 0
        %350 = vmatpush1.bf16.msra.mxu0 0
        %351 = vmatprep.subr.bf16.mxu0 0
        %352 = vmatpush1.bf16.msra.mxu0 0
        %353 = vmatprep.subr.bf16.mxu0 0
        %354 = vmatpush1.bf16.msra.mxu0 0
        %355 = vmatprep.subr.bf16.mxu0 0
        %356 = vmatpush1.bf16.msra.mxu0 0
        %357 = vmatprep.subr.bf16.mxu0 0
        %358 = vmatpush1.bf16.msra.mxu0 0
        %359 = vmatprep.subr.bf16.mxu0 0
        %360 = vmatpush1.bf16.msra.mxu0 0
        %361 = vmatprep.subr.bf16.mxu0 0
        %362 = vmatpush1.bf16.msra.mxu0 0
        %363 = vmatprep.subr.bf16.mxu0 0
        %364 = vmatpush1.bf16.msra.mxu0 0
        %365 = vmatprep.subr.bf16.mxu0 0
        %366 = vmatpush1.bf16.msra.mxu0 0
        %367 = vmatprep.subr.bf16.mxu0 0
        %368 = vmatpush1.bf16.msra.mxu0 0
        %369 = vmatprep.subr.bf16.mxu0 0
        %370 = vmatpush1.bf16.msra.mxu0 0
        %371 = vmatprep.subr.bf16.mxu0 0
        %372 = vmatpush1.bf16.msra.mxu0 0
        %373 = vmatprep.subr.bf16.mxu0 0
        %374 = vmatpush1.bf16.msra.mxu0 0
        %375 = vmatprep.mubr.bf16.mxu0 0
        %376 = vmatmul.mubr.bf16.gmra.mrb[0].mxu0 %v334
        %v377 = vpop.f32.mrb[0].mxu0
        %v378 = vadd.f32 %v315, %v377
        %v379 = vpop.f32.mrb[0].mxu0
        %v380 = vadd.f32 %v315, %v379
        %v381 = vpop.f32.mrb[0].mxu0
        %v382 = vadd.f32 %v320, %v381
        %v383 = vpop.f32.mrb[0].mxu0
        %v384 = vadd.f32 %v320, %v383
        %385 = vdwg.mxu0
        %v386 = vmax.f32 %v378, 0.0
        %v387 = vmax.f32 %v380, 0.0
        %v388 = vmax.f32 %v382, 0.0
        %v389 = vmax.f32 %v384, 0.0
        %v390 = vld [vmem:[%s3] sm:$0xff]
        %v391 = vld [vmem:[%s3 + $0x8] sm:$0x3]
        %v392 = vld [vmem:[%s4] sm:$0xff]
        %v393 = vld [vmem:[%s4 + $0x8] sm:$0x3]
        %395 = vset.pattern.permute.xlu0 0
        %396 = vperm.xlu0 %395, %v392
        %v397 = vpop.permute.xlu0 %396
        %400 = vset.pattern.permute.xlu0 0
        %401 = vperm.xlu0 %400, %v393
        %v402 = vpop.permute.xlu0 %401
        %vm404 = vcmask 80896
        %v406 = vsel %vm404, %v390, 0
        %v409 = vsel %vm404, %v391, 0
        %vm411 = vcmask 1041408
        %v413 = vsel %vm411, %v388, 0
        %v416 = vsel %vm411, %v389, 0
        %418 = vmatprep.subr.mxu0 %v387
        %419 = vmatpush1.msra.mxu0 %v386
        %420 = vmatprep.subr.mxu0 %v416
        %421 = vmatpush1.msra.mxu0 %v413
        %422 = vmatprep.subr.mxu0 0.0
        %423 = vmatpush1.msra.mxu0 0.0
        %424 = vmatprep.subr.mxu0 0.0
        %425 = vmatpush1.msra.mxu0 0.0
        %426 = vmatprep.subr.mxu0 0.0
        %427 = vmatpush1.msra.mxu0 0.0
        %428 = vmatprep.subr.mxu0 0.0
        %429 = vmatpush1.msra.mxu0 0.0
        %430 = vmatprep.subr.mxu0 0.0
        %431 = vmatpush1.msra.mxu0 0.0
        %432 = vmatprep.subr.mxu0 0.0
        %433 = vmatpush1.msra.mxu0 0.0
        %434 = vmatprep.subr.mxu0 0.0
        %435 = vmatpush1.msra.mxu0 0.0
        %436 = vmatprep.subr.mxu0 0.0
        %437 = vmatpush1.msra.mxu0 0.0
        %438 = vmatprep.subr.mxu0 0.0
        %439 = vmatpush1.msra.mxu0 0.0
        %440 = vmatprep.subr.mxu0 0.0
        %441 = vmatpush1.msra.mxu0 0.0
        %442 = vmatprep.subr.mxu0 0.0
        %443 = vmatpush1.msra.mxu0 0.0
        %444 = vmatprep.subr.mxu0 0.0
        %445 = vmatpush1.msra.mxu0 0.0
        %446 = vmatprep.subr.mxu0 0.0
        %447 = vmatpush1.msra.mxu0 0.0
        %448 = vmatprep.subr.mxu0 0.0
        %449 = vmatpush1.msra.mxu0 0.0
        %450 = vmatprep.subr.mxu0 0.0
        %451 = vmatpush1.msra.mxu0 0.0
        %452 = vmatprep.subr.mxu0 0.0
        %453 = vmatpush1.msra.mxu0 0.0
        %454 = vmatprep.subr.mxu0 0.0
        %455 = vmatpush1.msra.mxu0 0.0
        %456 = vmatprep.subr.mxu0 0.0
        %457 = vmatpush1.msra.mxu0 0.0
        %458 = vmatprep.subr.mxu0 0.0
        %459 = vmatpush1.msra.mxu0 0.0
        %460 = vmatprep.subr.mxu0 0.0
        %461 = vmatpush1.msra.mxu0 0.0
        %462 = vmatprep.subr.mxu0 0.0
        %463 = vmatpush1.msra.mxu0 0.0
        %464 = vmatprep.subr.mxu0 0.0
        %465 = vmatpush1.msra.mxu0 0.0
        %466 = vmatprep.subr.mxu0 0.0
        %467 = vmatpush1.msra.mxu0 0.0
        %468 = vmatprep.subr.mxu0 0.0
        %469 = vmatpush1.msra.mxu0 0.0
        %470 = vmatprep.subr.mxu0 0.0
        %471 = vmatpush1.msra.mxu0 0.0
        %472 = vmatprep.subr.mxu0 0.0
        %473 = vmatpush1.msra.mxu0 0.0
        %474 = vmatprep.subr.mxu0 0.0
        %475 = vmatpush1.msra.mxu0 0.0
        %476 = vmatprep.subr.mxu0 0.0
        %477 = vmatpush1.msra.mxu0 0.0
        %478 = vmatprep.subr.mxu0 0.0
        %479 = vmatpush1.msra.mxu0 0.0
        %480 = vmatprep.subr.mxu0 0.0
        %481 = vmatpush1.msra.mxu0 0.0
        %482 = vmatprep.mubr.f32.mxu0 0.0
        %483 = vmatmul.mubr.f32.gmra.mrb[0].mxu0 %v406
        %v484 = vpop.f32.mrb[0].mxu0
        %v485 = vadd.f32 %v397, %v484
        %v486 = vpop.f32.mrb[0].mxu0
        %v487 = vadd.f32 %v397, %v486
        %488 = vmatprep.mubr.f32.mxu0 0.0
        %489 = vmatmul.mubr.f32.gmra.mrb[0].mxu0 %v409
        %v490 = vpop.f32.mrb[0].mxu0
        %v491 = vadd.f32 %v402, %v490
        %v492 = vpop.f32.mrb[0].mxu0
        %v493 = vadd.f32 %v402, %v492
        %494 = vdwg.mxu0
        %v495 = vmax.f32 %v485, 0.0
        %v496 = vmax.f32 %v487, 0.0
        %v497 = vmax.f32 %v491, 0.0
        %v498 = vmax.f32 %v493, 0.0
        %v499 = vld [vmem:[%s5] sm:$0x1]
        %v500 = vld [vmem:[#allocation2] sm:$0x1]
        %502 = vset.pattern.permute.xlu0 0
        %503 = vperm.xlu0 %502, %v500
        %v504 = vpop.permute.xlu0 %503
        %v506 = vlaneseq
        %v507 = vshrl.u32 %v506, 7
        %v508 = vsub.s32 0, %v507
        %v509 = vrot.slane %v504, %v508
        %v511 = vsel %vm404, %v499, 0
        %v514 = vsel %vm411, %v497, 0
        %v517 = vsel %vm411, %v498, 0
        %519 = vmatprep.subr.mxu0 %v496
        %520 = vmatpush1.msra.mxu0 %v495
        %521 = vmatprep.subr.mxu0 %v517
        %522 = vmatpush1.msra.mxu0 %v514
        %523 = vmatprep.subr.mxu0 0.0
        %524 = vmatpush1.msra.mxu0 0.0
        %525 = vmatprep.subr.mxu0 0.0
        %526 = vmatpush1.msra.mxu0 0.0
        %527 = vmatprep.subr.mxu0 0.0
        %528 = vmatpush1.msra.mxu0 0.0
        %529 = vmatprep.subr.mxu0 0.0
        %530 = vmatpush1.msra.mxu0 0.0
        %531 = vmatprep.subr.mxu0 0.0
        %532 = vmatpush1.msra.mxu0 0.0
        %533 = vmatprep.subr.mxu0 0.0
        %534 = vmatpush1.msra.mxu0 0.0
        %535 = vmatprep.subr.mxu0 0.0
        %536 = vmatpush1.msra.mxu0 0.0
        %537 = vmatprep.subr.mxu0 0.0
        %538 = vmatpush1.msra.mxu0 0.0
        %539 = vmatprep.subr.mxu0 0.0
        %540 = vmatpush1.msra.mxu0 0.0
        %541 = vmatprep.subr.mxu0 0.0
        %542 = vmatpush1.msra.mxu0 0.0
        %543 = vmatprep.subr.mxu0 0.0
        %544 = vmatpush1.msra.mxu0 0.0
        %545 = vmatprep.subr.mxu0 0.0
        %546 = vmatpush1.msra.mxu0 0.0
        %547 = vmatprep.subr.mxu0 0.0
        %548 = vmatpush1.msra.mxu0 0.0
        %549 = vmatprep.subr.mxu0 0.0
        %550 = vmatpush1.msra.mxu0 0.0
        %551 = vmatprep.subr.mxu0 0.0
        %552 = vmatpush1.msra.mxu0 0.0
        %553 = vmatprep.subr.mxu0 0.0
        %554 = vmatpush1.msra.mxu0 0.0
        %555 = vmatprep.subr.mxu0 0.0
        %556 = vmatpush1.msra.mxu0 0.0
        %557 = vmatprep.subr.mxu0 0.0
        %558 = vmatpush1.msra.mxu0 0.0
        %559 = vmatprep.subr.mxu0 0.0
        %560 = vmatpush1.msra.mxu0 0.0
        %561 = vmatprep.subr.mxu0 0.0
        %562 = vmatpush1.msra.mxu0 0.0
        %563 = vmatprep.subr.mxu0 0.0
        %564 = vmatpush1.msra.mxu0 0.0
        %565 = vmatprep.subr.mxu0 0.0
        %566 = vmatpush1.msra.mxu0 0.0
        %567 = vmatprep.subr.mxu0 0.0
        %568 = vmatpush1.msra.mxu0 0.0
        %569 = vmatprep.subr.mxu0 0.0
        %570 = vmatpush1.msra.mxu0 0.0
        %571 = vmatprep.subr.mxu0 0.0
        %572 = vmatpush1.msra.mxu0 0.0
        %573 = vmatprep.subr.mxu0 0.0
        %574 = vmatpush1.msra.mxu0 0.0
        %575 = vmatprep.subr.mxu0 0.0
        %576 = vmatpush1.msra.mxu0 0.0
        %577 = vmatprep.subr.mxu0 0.0
        %578 = vmatpush1.msra.mxu0 0.0
        %579 = vmatprep.subr.mxu0 0.0
        %580 = vmatpush1.msra.mxu0 0.0
        %581 = vmatprep.subr.mxu0 0.0
        %582 = vmatpush1.msra.mxu0 0.0
        %583 = vmatprep.mubr.f32.mxu0 0.0
        %584 = vmatmul.mubr.f32.gmra.mrb[0].mxu0 %v511
        %v585 = vpop.f32.mrb[0].mxu0
        %v586 = vadd.f32 %v509, %v585
        %v587 = vpop.f32.mrb[0].mxu0
        %v588 = vadd.f32 %v509, %v587
        %589 = vdwg.mxu0
        %v592 = vcombine.low %v586, %v588
        %v594 = vunpack.c.l.s4 1966171168
        %v595 = vunpack.c.0.s8 %v594
        %v596 = vlaneseq
        %v597 = vshrl.u32 %v596, 7
        %v598 = vsub.s32 %v595, %v597
        %v599 = vrot.slane %v592, %v598
        %v601 = vunpack.c.l.s4 1966171168
        %v602 = vunpack.c.0.s8 %v601
        %v603 = vlaneseq
        %v604 = vshrl.u32 %v603, 7
        %v605 = vsub.s32 %v602, %v604
        %v606 = vrot.slane %v599, %v605
        %v608 = vlaneseq
        %vm609 = vcmp.ge.s32.totalorder %v608, 0
        %vm610 = vcmp.lt.s32.totalorder %v608, 256
        %vm611 = vmand %vm609, %vm610
        %612 = vst.msk [vmem:[%s286] sm:$0x3] %vm611, %v606
        %s613 = sand.u32 %s183, 1
        %s614 = scalar_lea.sflag [#allocation4], %s613
        %s615 = sand.u32 %s183, 1
        %s616 = smul.addr %s615, 2
        %s617 = scalar_lea.vmem [#allocation3], %s616
        // Predicated region
        $region49: #{tpu_custom_call.1} parent=47 // pred_check
          %p618 = pneg %p193
        $region50: #{tpu_custom_call.1} parent=47 // pred_check_branch
          %620 = sbr.rel (%p618) target = $region52
        $region51: #{tpu_custom_call.1} parent=47 // pred_region
          %s621 = smul.u32 2, %s23
          %s622 = ssub.s32 3, %s621
          %p623 = scmp.lt.s32.totalorder %s622, 2
          %s624 = scalar_select %p623, %s622, 2
          %s625 = smul.u32 16, %s624
          %s627 = ssub.s32 32, %s625
          %628 = vsyncadd %s614, %s627
          %p629 = scmp.ne.s32.totalorder 0, %s625
          %s630 = smul.addr %s621, 16
          %s631 = scalar_lea.hbm %s7, %s630
          %s632 = sshll.u32 %s624, 4
          %s633 = sshll.u32 %s617, 4
          %s634 = int_to_ptr.vmem [resolvable:$true] %s633
          %636 = dma.vmem_to_hbm [thread:$0]  (%p629), %s634, %s632, %s631, %s614
        $region52: #{tpu_custom_call.1} parent=47 // pred_fallthru
          _
      $region48: #{tpu_custom_call.1} parent=5 // pred_fallthru
        _
      %p637 = scmp.le.s32.totalorder 2, %s18
      // Predicated region
      $region53: #{tpu_custom_call.1} parent=5 // pred_check
        %p638 = pneg %p637
      $region54: #{tpu_custom_call.1} parent=5 // pred_check_branch
        %640 = sbr.rel (%p638) target = $region56
      $region55: #{tpu_custom_call.1} parent=5 // pred_region
        %s641 = ssub.s32 %s18, 2
        // Predicated region
        $region57: #{tpu_custom_call.1} parent=55 // pred_check
          %p642 = pneg %p199
        $region58: #{tpu_custom_call.1} parent=55 // pred_check_branch
          %644 = sbr.rel (%p642) target = $region60
        $region59: #{tpu_custom_call.1} parent=55 // pred_region
          %s645 = sand.u32 %s184, 1
          %s646 = scalar_lea.sflag [#allocation4], %s645
          %s647 = sand.u32 %s184, 1
          %s648 = smul.addr %s647, 2
          %s649 = scalar_lea.vmem [#allocation3], %s648
          %650 = dma.done %s646, 32
        $region60: #{tpu_custom_call.1} parent=55 // pred_fallthru
          _
      $region56: #{tpu_custom_call.1} parent=5 // pred_fallthru
        _
    $region6: #{tpu_custom_call.1} parent=1 // loop_footer
      %s22 = sadd.s32 1, %s18
    $region7: #{tpu_custom_call.1} parent=1 // loop_footer_branch
      %17 = sbr.rel target = $region3
    $region8: #{tpu_custom_call.1} parent=1 // loop_exit
      _
    %651 = vsyncpa [#allocation4], 1
    %s652 = scalar_lea.sflag [#allocation4], 1
    %653 = vsyncpa %s652, 1

</llo_original>
